<compile_context>
chip_gen: v5e
topology: v5e:2x2
jax: 0.10.0
libtpu: 0.0.40
codegen_flags: <defaults>
</compile_context>

<pallas_src>
import functools

import jax
import jax.numpy as jnp
from jax.experimental import pallas as pl
from jax.experimental.pallas import tpu as pltpu


NC = 512
IN_F = 14 * 3
BN_EPS = 1e-5
VMEM_LIMIT = 48 * 1024 * 1024  # safe on v5e/v6e (128 MiB) and v7x (64 MiB/TC)

LAYER_DIMS = [
    (IN_F, NC),          # Linear(42, 512)     + LeakyReLU
    (NC, NC * 2),        # Linear(512, 1024)   + BN + LeakyReLU
    (NC * 2, NC * 4),    # Linear(1024, 2048)  + BN + LeakyReLU
    (NC * 4, NC * 8),    # Linear(2048, 4096)  + BN + LeakyReLU
    (NC * 8, 1),         # Linear(4096, 1)     + Sigmoid (folded into layer 4)
]


# --------------------------- single fused layer ---------------------------
# y = leaky_relu((x @ W) * scale + shift), full K in one step.
def _fused_linear_kernel(x_ref, w_ref, scale_ref, shift_ref, o_ref):
    y = jnp.dot(x_ref[...], w_ref[...], preferred_element_type=jnp.float32)
    y = y * scale_ref[...] + shift_ref[...]
    y = jnp.where(y > 0, y, 0.2 * y)
    o_ref[...] = y.astype(o_ref.dtype)


def fused_linear(x, w, scale, shift, *, tm, out_dtype=jnp.bfloat16):
    """x: (M, K) bf16, w: (K, N) bf16, scale/shift: (1, N) f32 -> (M, N) bf16."""
    M, K = x.shape
    K2, N = w.shape
    assert K == K2 and M % tm == 0
    tn = min(N, 1024)
    assert N % tn == 0
    grid = (M // tm, N // tn)

    return pl.pallas_call(
        _fused_linear_kernel,
        out_shape=jax.ShapeDtypeStruct((M, N), out_dtype),
        grid_spec=pltpu.PrefetchScalarGridSpec(
            num_scalar_prefetch=0,
            grid=grid,
            in_specs=[
                pl.BlockSpec((tm, K), lambda i, j: (i, 0)),   # x (full K)
                pl.BlockSpec((K, tn), lambda i, j: (0, j)),   # W (full K)
                pl.BlockSpec((1, tn), lambda i, j: (0, j)),   # scale
                pl.BlockSpec((1, tn), lambda i, j: (0, j)),   # shift
            ],
            out_specs=pl.BlockSpec((tm, tn), lambda i, j: (i, j)),
        ),
        compiler_params=pltpu.CompilerParams(
            dimension_semantics=("parallel", "parallel"),
            vmem_limit_bytes=VMEM_LIMIT,
        ),
    )(x, w, scale, shift)


# ------------------- fused tail: layer 4 + final layer --------------------
# h = leaky_relu((x @ W4[:, tile]) * scale + shift)          (MXU, per N tile)
# logit += sum(h * w5[tile], axis=-1)                        (VPU mul + lane reduce)
# out = sigmoid(logit)                                       (on last N tile)
def _fused_tail_kernel(x_ref, w4_ref, s4_ref, b4_ref, w5_ref, o_ref, acc_ref):
    j = pl.program_id(1)

    @pl.when(j == 0)
    def _():
        acc_ref[...] = jnp.zeros_like(acc_ref)

    h = jnp.dot(x_ref[...], w4_ref[...], preferred_element_type=jnp.float32)
    h = h * s4_ref[...] + b4_ref[...]
    h = jnp.where(h > 0, h, 0.2 * h)
    acc_ref[...] += jnp.sum(h * w5_ref[...], axis=-1, keepdims=True)

    @pl.when(j == pl.num_programs(1) - 1)
    def _():
        z = acc_ref[...]
        o_ref[...] = (1.0 / (1.0 + jnp.exp(-z))).astype(o_ref.dtype)


def fused_tail(x, w4, scale4, shift4, w5_row, *, tm):
    """x: (M, 2048) bf16, w4: (2048, 4096) bf16, scale4/shift4/w5_row: (1, 4096) f32."""
    M, K = x.shape
    K2, N = w4.shape
    assert K == K2 and M % tm == 0
    tn = min(N, 1024)
    assert N % tn == 0
    grid = (M // tm, N // tn)

    return pl.pallas_call(
        _fused_tail_kernel,
        out_shape=jax.ShapeDtypeStruct((M, 1), jnp.float32),
        grid_spec=pltpu.PrefetchScalarGridSpec(
            num_scalar_prefetch=0,
            grid=grid,
            in_specs=[
                pl.BlockSpec((tm, K), lambda i, j: (i, 0)),   # x (full K)
                pl.BlockSpec((K, tn), lambda i, j: (0, j)),   # W4 tile
                pl.BlockSpec((1, tn), lambda i, j: (0, j)),   # scale4
                pl.BlockSpec((1, tn), lambda i, j: (0, j)),   # shift4
                pl.BlockSpec((1, tn), lambda i, j: (0, j)),   # w5 row tile
            ],
            out_specs=pl.BlockSpec((tm, 1), lambda i, j: (i, 0)),
            scratch_shapes=[pltpu.VMEM((tm, 1), jnp.float32)],
        ),
        compiler_params=pltpu.CompilerParams(
            dimension_semantics=("parallel", "arbitrary"),
            vmem_limit_bytes=VMEM_LIMIT,
        ),
    )(x, w4, scale4, shift4, w5_row)


# ------------------ parameter construction (deterministic) ----------------
def init_params(key):
    params = []
    for i, (fin, fout) in enumerate(LAYER_DIMS):
        kw, kg, kb, km, kv = jax.random.split(jax.random.fold_in(key, i), 5)
        w = 0.05 * jax.random.normal(kw, (fin, fout), dtype=jnp.float32)
        if i == 4:
            # Final Linear(4096, 1): stored as an f32 (1, 4096) row, consumed by
            # the fused tail epilogue (negligible bytes, keeps full precision).
            params.append(dict(w_row=w.reshape(1, fin)))
            continue
        has_bn = i in (1, 2, 3)
        if has_bn:
            gamma = 1.0 + 0.1 * jax.random.normal(kg, (fout,), dtype=jnp.float32)
            beta = 0.1 * jax.random.normal(kb, (fout,), dtype=jnp.float32)
            rmean = 0.1 * jax.random.normal(km, (fout,), dtype=jnp.float32)
            rvar = 1.0 + 0.1 * jax.random.uniform(kv, (fout,), dtype=jnp.float32)
            scale = gamma / jnp.sqrt(rvar + BN_EPS)
            shift = beta - rmean * scale
        else:
            scale = jnp.ones((fout,), dtype=jnp.float32)
            shift = jnp.zeros((fout,), dtype=jnp.float32)
        params.append(dict(
            w=w.astype(jnp.bfloat16),                 # streamed as bf16
            scale=scale.reshape(1, fout),             # f32 epilogue
            shift=shift.reshape(1, fout),
        ))
    return params


# ------------------------------- forward ----------------------------------
def joints_discriminator_forward(x, params):
    """x: any shape reshapeable to (-1, 14*3)."""
    h = x.reshape(-1, IN_F).astype(jnp.float32)
    M = h.shape[0]
    if M <= 256:
        tm, Mp = M, M
    else:
        tm = 256
        Mp = int(pl.cdiv(M, tm)) * tm
    if Mp != M:
        h = jnp.pad(h, ((0, Mp - M), (0, 0)))
    h = h.astype(jnp.bfloat16)

    for p in params[:3]:
        h = fused_linear(h, p["w"], p["scale"], p["shift"], tm=tm)

    p4, p5 = params[3], params[4]
    out = fused_tail(h, p4["w"], p4["scale"], p4["shift"], p5["w_row"], tm=tm)
    return out[:M]


def reference_forward(x, params):
    """Pure-JAX reference mirroring the kernel's dtype flow (bf16 weights/acts,
    f32 accumulation/epilogue)."""
    h = x.reshape(-1, IN_F).astype(jnp.bfloat16)
    for p in params[:3]:
        y = jnp.dot(h, p["w"], preferred_element_type=jnp.float32)
        y = y * p["scale"] + p["shift"]
        y = jnp.where(y > 0, y, 0.2 * y)
        h = y.astype(jnp.bfloat16)
    p4 = params[3]
    y = jnp.dot(h, p4["w"], preferred_element_type=jnp.float32)
    y = y * p4["scale"] + p4["shift"]
    h4 = jnp.where(y > 0, y, 0.2 * y)
    logit = jnp.sum(h4 * params[4]["w_row"], axis=-1, keepdims=True)
    return 1.0 / (1.0 + jnp.exp(-logit))


if __name__ == "__main__":
    key = jax.random.PRNGKey(0)
    kx, kp = jax.random.split(key)

    # 8 "poses" of 14 joints x 3 coords, as the module's view(-1, 14*3) implies.
    x = jax.random.normal(kx, (8, 14, 3), dtype=jnp.float32)
    params = init_params(kp)

    out = joints_discriminator_forward(x, params)
    out = jax.block_until_ready(out)
    assert out.shape == (8, 1), out.shape

    ref = reference_forward(x, params)
    max_err = float(jnp.max(jnp.abs(out - ref)))
    assert jnp.allclose(out, ref, atol=2e-3, rtol=2e-3), max_err

    print("KERNEL_OK")
</pallas_src>

<mosaic_0001>
module attributes {stable_mosaic.version = 11 : i64} {
  func.func @_fused_linear_kernel(%arg0: i32, %arg1: i32, %arg2: memref<8x42xbf16, #tpu.memory_space<vmem>>, %arg3: memref<42x512xbf16, #tpu.memory_space<vmem>>, %arg4: memref<1x512xf32, #tpu.memory_space<vmem>>, %arg5: memref<1x512xf32, #tpu.memory_space<vmem>>, %arg6: memref<8x512xbf16, #tpu.memory_space<vmem>>) attributes {dimension_semantics = [#tpu.dimension_semantics<parallel>, #tpu.dimension_semantics<parallel>], iteration_bounds = array<i64: 1, 1>, scalar_prefetch = 0 : i64, scratch_operands = 0 : i64, tpu.core_type = #tpu.core_type<tc>, window_params = [{transform_indices = @transform_0, window_bounds = array<i64: 8, 42>}, {transform_indices = @transform_1, window_bounds = array<i64: 42, 512>}, {transform_indices = @transform_2, window_bounds = array<i64: 1, 512>}, {transform_indices = @transform_3, window_bounds = array<i64: 1, 512>}, {transform_indices = @transform_4, window_bounds = array<i64: 8, 512>}]} {
    %c0 = arith.constant 0 : index
    %c0_0 = arith.constant 0 : index
    %0 = vector.load %arg2[%c0, %c0_0] : memref<8x42xbf16, #tpu.memory_space<vmem>>, vector<8x42xbf16>
    %c0_1 = arith.constant 0 : index
    %c0_2 = arith.constant 0 : index
    %1 = vector.load %arg3[%c0_1, %c0_2] : memref<42x512xbf16, #tpu.memory_space<vmem>>, vector<42x512xbf16>
    %cst = arith.constant dense<0.000000e+00> : vector<8x512xf32>
    %2 = tpu.matmul %0, %1, %cst {dimension_numbers = #tpu.dot_dimension_numbers<[1], [0], [0], [1], [0, 0, 1, 1], [], []>} : vector<8x42xbf16>, vector<42x512xbf16>, vector<8x512xf32> -> vector<8x512xf32>
    %c0_3 = arith.constant 0 : index
    %c0_4 = arith.constant 0 : index
    %3 = vector.load %arg4[%c0_3, %c0_4] : memref<1x512xf32, #tpu.memory_space<vmem>>, vector<1x512xf32>
    %4 = vector.broadcast %3 : vector<1x512xf32> to vector<8x512xf32>
    %5 = arith.mulf %2, %4 : vector<8x512xf32>
    %c0_5 = arith.constant 0 : index
    %c0_6 = arith.constant 0 : index
    %6 = vector.load %arg5[%c0_5, %c0_6] : memref<1x512xf32, #tpu.memory_space<vmem>>, vector<1x512xf32>
    %7 = vector.broadcast %6 : vector<1x512xf32> to vector<8x512xf32>
    %8 = arith.addf %5, %7 : vector<8x512xf32>
    %cst_7 = arith.constant 0.000000e+00 : f32
    %9 = vector.broadcast %cst_7 : f32 to vector<8x512xf32>
    %10 = arith.cmpf ogt, %8, %9 : vector<8x512xf32>
    %cst_8 = arith.constant 2.000000e-01 : f32
    %11 = vector.broadcast %cst_8 : f32 to vector<8x512xf32>
    %12 = arith.mulf %11, %8 : vector<8x512xf32>
    %13 = arith.select %10, %8, %12 : vector<8x512xi1>, vector<8x512xf32>
    %14 = arith.truncf %13 : vector<8x512xf32> to vector<8x512xbf16>
    %c0_9 = arith.constant 0 : index
    %c0_10 = arith.constant 0 : index
    %15 = vector.load %arg6[%c0_9, %c0_10] : memref<8x512xbf16, #tpu.memory_space<vmem>>, vector<8x512xbf16>
    tpu.vector_store %arg6[%c0_9, %c0_10], %14 {strides = array<i32>} : memref<8x512xbf16, #tpu.memory_space<vmem>>, vector<8x512xbf16>,
    return
  }
  func.func @transform_0(%arg0: i32, %arg1: i32) -> (i32, i32) {
    %c0_i32 = arith.constant 0 : i32
    %c0_i32_0 = arith.constant 0 : i32
    return %arg0, %c0_i32 : i32, i32
  }
  func.func @transform_1(%arg0: i32, %arg1: i32) -> (i32, i32) {
    %c0_i32 = arith.constant 0 : i32
    %c0_i32_0 = arith.constant 0 : i32
    return %c0_i32, %arg1 : i32, i32
  }
  func.func @transform_2(%arg0: i32, %arg1: i32) -> (i32, i32) {
    %c0_i32 = arith.constant 0 : i32
    %c0_i32_0 = arith.constant 0 : i32
    return %c0_i32, %arg1 : i32, i32
  }
  func.func @transform_3(%arg0: i32, %arg1: i32) -> (i32, i32) {
    %c0_i32 = arith.constant 0 : i32
    %c0_i32_0 = arith.constant 0 : i32
    return %c0_i32, %arg1 : i32, i32
  }
  func.func @transform_4(%arg0: i32, %arg1: i32) -> (i32, i32) {
    %c0_i32 = arith.constant 0 : i32
    return %arg0, %arg1 : i32, i32
  }
}

</mosaic_0001>

<llo_original>
// kernel: tpu_custom_call.1
$region0: #{tpu_custom_call.1}
  #allocation0 [shape = 'u32[]', space=smem, size = 0x4, offset = 0x4, fixed_abs, tag = 'smem constant byte address 0x4 - core index']
  #allocation1 [shape = 'u32[72,128]{1,0:T(1,128)}', space=vmem, size = 0x9000, scoped, tag = 'internal scratch']
  %s0 = inlined_call_operand.hbm [shape: bf16[8,42], index: 0, kind: input, shape index: {}]
  %s1 = inlined_call_operand.hbm [shape: bf16[42,512], index: 1, kind: input, shape index: {}]
  %s2 = inlined_call_operand.hbm [shape: f32[1,512], index: 2, kind: input, shape index: {}]
  %s3 = inlined_call_operand.hbm [shape: f32[1,512], index: 3, kind: input, shape index: {}]
  %s4 = inlined_call_operand.hbm [shape: bf16[8,512], index: 4, kind: output, shape index: {}]
  %s5 = sld [smem:[#allocation0]]
  $region42: #{tpu_custom_call.1} parent=0
    _
  %s7 = ssub.s32 1, %s5
  %s8 = scalar_select 0, %s7, %s5
  $region1: #{tpu_custom_call.1} parent=0
    #allocation2 [shape = 'u8[2048]{0}', space=vmem, size = 0x800, scoped, tag = 'input window, operand 0, single buffered']
    #allocation3 [shape = 's32[1]{0}', space=sflag, size = 0x4, scoped, tag = 'scoped memory for tpu_custom_call.1']
    #allocation4 [shape = 's32[1]{0}', space=sflag, size = 0x4, scoped, tag = 'scoped memory for tpu_custom_call.1']
    #allocation5 [shape = 'u8[49152]{0}', space=vmem, size = 0xc000, scoped, tag = 'input window, operand 1, single buffered']
    #allocation6 [shape = 's32[1]{0}', space=sflag, size = 0x4, scoped, tag = 'scoped memory for tpu_custom_call.1']
    #allocation7 [shape = 'u8[2048]{0}', space=vmem, size = 0x800, scoped, tag = 'input window, operand 2, single buffered']
    #allocation8 [shape = 'u8[2048]{0}', space=vmem, size = 0x800, scoped, tag = 'input window, operand 3, single buffered']
    #allocation9 [shape = 's32[1]{0}', space=sflag, size = 0x4, scoped, tag = 'scoped memory for tpu_custom_call.1']
    #allocation10 [shape = 'u8[8192]{0}', space=vmem, size = 0x2000, scoped, tag = 'output window, operand 0, single buffered']
    %9 = vsyncpa [#allocation3], 0
    %10 = vsyncpa [#allocation6], 0
    %11 = vsyncpa [#allocation9], 0
    %12 = vsyncpa [#allocation4], 0
    // Predicated region
    $region2: #{tpu_custom_call.1} parent=1 // pred_check
      _
    $region3: #{tpu_custom_call.1} parent=1 // pred_check_branch
      %14 = sbr.rel (0) target = $region5
    $region4: #{tpu_custom_call.1} parent=1 // pred_region
      %16 = vsyncadd [#allocation3], 0
      %s18 = sshll.u32 %s0, 4
      %s19 = int_to_ptr.hbm [resolvable:$true] %s18
      %s20 = sshll.u32 [#allocation2], 4
      %s21 = int_to_ptr.vmem [resolvable:$true] %s20
      %23 = dma.hbm_to_vmem [thread:$0]  %s19, 64, %s21, [#allocation3]
    $region5: #{tpu_custom_call.1} parent=1 // pred_fallthru
      _
    // Predicated region
    $region6: #{tpu_custom_call.1} parent=1 // pred_check
      _
    $region7: #{tpu_custom_call.1} parent=1 // pred_check_branch
      %25 = sbr.rel (0) target = $region9
    $region8: #{tpu_custom_call.1} parent=1 // pred_region
      %27 = vsyncadd [#allocation6], 0
      %s28 = sshll.u32 %s1, 4
      %s29 = int_to_ptr.hbm [resolvable:$true] %s28
      %s30 = sshll.u32 [#allocation5], 4
      %s31 = int_to_ptr.vmem [resolvable:$true] %s30
      %36 = dma.hbm_to_vmem [thread:$0]  %s29, 1536, %s31, [#allocation6], 256, 256, 16
    $region9: #{tpu_custom_call.1} parent=1 // pred_fallthru
      _
    // Predicated region
    $region10: #{tpu_custom_call.1} parent=1 // pred_check
      _
    $region11: #{tpu_custom_call.1} parent=1 // pred_check_branch
      %38 = sbr.rel (0) target = $region13
    $region12: #{tpu_custom_call.1} parent=1 // pred_region
      %40 = vsyncadd [#allocation6], 0
      %s42 = sshll.u32 %s2, 4
      %s43 = int_to_ptr.hbm [resolvable:$true] %s42
      %s44 = sshll.u32 [#allocation7], 4
      %s45 = int_to_ptr.vmem [resolvable:$true] %s44
      %47 = dma.hbm_to_vmem [thread:$0]  %s43, 64, %s45, [#allocation6]
    $region13: #{tpu_custom_call.1} parent=1 // pred_fallthru
      _
    // Predicated region
    $region14: #{tpu_custom_call.1} parent=1 // pred_check
      _
    $region15: #{tpu_custom_call.1} parent=1 // pred_check_branch
      %49 = sbr.rel (0) target = $region17
    $region16: #{tpu_custom_call.1} parent=1 // pred_region
      %51 = vsyncadd [#allocation9], 0
      %s53 = sshll.u32 %s3, 4
      %s54 = int_to_ptr.hbm [resolvable:$true] %s53
      %s55 = sshll.u32 [#allocation8], 4
      %s56 = int_to_ptr.vmem [resolvable:$true] %s55
      %58 = dma.hbm_to_vmem [thread:$0]  %s54, 64, %s56, [#allocation9]
    $region17: #{tpu_custom_call.1} parent=1 // pred_fallthru
      _
    // Predicated region
    $region18: #{tpu_custom_call.1} parent=1 // pred_check
      _
    $region19: #{tpu_custom_call.1} parent=1 // pred_check_branch
      %60 = sbr.rel (0) target = $region21
    $region20: #{tpu_custom_call.1} parent=1 // pred_region
      %62 = dma.done [#allocation3], 64
    $region21: #{tpu_custom_call.1} parent=1 // pred_fallthru
      _
    // Predicated region
    $region22: #{tpu_custom_call.1} parent=1 // pred_check
      _
    $region23: #{tpu_custom_call.1} parent=1 // pred_check_branch
      %64 = sbr.rel (0) target = $region25
    $region24: #{tpu_custom_call.1} parent=1 // pred_region
      %66 = dma.done [#allocation6], 1536
    $region25: #{tpu_custom_call.1} parent=1 // pred_fallthru
      _
    // Predicated region
    $region26: #{tpu_custom_call.1} parent=1 // pred_check
      _
    $region27: #{tpu_custom_call.1} parent=1 // pred_check_branch
      %68 = sbr.rel (0) target = $region29
    $region28: #{tpu_custom_call.1} parent=1 // pred_region
      %70 = dma.done [#allocation6], 64
    $region29: #{tpu_custom_call.1} parent=1 // pred_fallthru
      _
    // Predicated region
    $region30: #{tpu_custom_call.1} parent=1 // pred_check
      _
    $region31: #{tpu_custom_call.1} parent=1 // pred_check_branch
      %72 = sbr.rel (0) target = $region33
    $region32: #{tpu_custom_call.1} parent=1 // pred_region
      %74 = dma.done [#allocation9], 64
    $region33: #{tpu_custom_call.1} parent=1 // pred_fallthru
      _
    %v76 = vld [vmem:[#allocation2] sm:$0xf]
    %v77 = vld [vmem:[#allocation5] sm:$0xff]
    %v78 = vld [vmem:[#allocation5 + $0x8] sm:$0xff]
    %v79 = vld [vmem:[#allocation5 + $0x10] sm:$0xff]
    %v80 = vld [vmem:[#allocation5 + $0x18] sm:$0xff]
    %v81 = vld [vmem:[#allocation5 + $0x20] sm:$0xff]
    %v82 = vld [vmem:[#allocation5 + $0x28] sm:$0xff]
    %v83 = vld [vmem:[#allocation5 + $0x30] sm:$0xff]
    %v84 = vld [vmem:[#allocation5 + $0x38] sm:$0xff]
    %v85 = vld [vmem:[#allocation5 + $0x40] sm:$0xff]
    %v86 = vld [vmem:[#allocation5 + $0x48] sm:$0xff]
    %v87 = vld [vmem:[#allocation5 + $0x50] sm:$0x11]
    %v88 = vld [vmem:[#allocation5 + $0x58] sm:$0x11]
    %v101 = vunpack.c.l.b16 %v77
    %v102 = vunpack.c.h.b16 %v77
    %v103 = vunpack.c.l.b16 %v78
    %v104 = vunpack.c.h.b16 %v78
    %v105 = vunpack.c.l.b16 %v79
    %v106 = vunpack.c.h.b16 %v79
    %v107 = vunpack.c.l.b16 %v80
    %v108 = vunpack.c.h.b16 %v80
    %v109 = vunpack.c.l.b16 %v81
    %v110 = vunpack.c.h.b16 %v81
    %v111 = vunpack.c.l.b16 %v82
    %v112 = vunpack.c.h.b16 %v82
    %v113 = vunpack.c.l.b16 %v83
    %v114 = vunpack.c.h.b16 %v83
    %v115 = vunpack.c.l.b16 %v84
    %v116 = vunpack.c.h.b16 %v84
    %v117 = vunpack.c.l.b16 %v85
    %v118 = vunpack.c.h.b16 %v85
    %v119 = vunpack.c.l.b16 %v86
    %v120 = vunpack.c.h.b16 %v86
    %v121 = vunpack.c.l.b16 %v87
    %v122 = vunpack.c.h.b16 %v87
    %v123 = vunpack.c.l.b16 %v88
    %v124 = vunpack.c.h.b16 %v88
    %v125 = vpack.c.b16 %v105, %v101
    %v126 = vpack.c.b16 %v106, %v102
    %v127 = vpack.c.b16 %v107, %v103
    %v128 = vpack.c.b16 %v108, %v104
    %v129 = vpack.c.b16 %v113, %v109
    %v130 = vpack.c.b16 %v114, %v110
    %v131 = vpack.c.b16 %v115, %v111
    %v132 = vpack.c.b16 %v116, %v112
    %v133 = vpack.c.b16 %v121, %v117
    %v134 = vpack.c.b16 %v122, %v118
    %v135 = vpack.c.b16 %v123, %v119
    %v136 = vpack.c.b16 %v124, %v120
    %vm145 = vcmask 343040
    %v147 = vsel %vm145, %v76, 0
    %vm149 = vcmask 1044480
    %v151 = vsel %vm149, %v133, 0
    %v154 = vsel %vm149, %v134, 0
    %v157 = vsel %vm149, %v135, 0
    %v160 = vsel %vm149, %v136, 0
    %162 = vmatpush.bf16.msra.mxu0 0
    %163 = vmatpush.bf16.msra.mxu0 0
    %164 = vmatpush.bf16.msra.mxu0 0
    %165 = vmatpush.bf16.msra.mxu0 0
    %166 = vmatpush.bf16.msra.mxu0 0
    %167 = vmatpush.bf16.msra.mxu0 %v151
    %168 = vmatpush.bf16.msra.mxu0 %v129
    %169 = vmatpush.bf16.msra.mxu0 %v125
    %170 = vmatmul.bf16.gmra.mxu0 %v147
    %v171 = vpop.f32.mrf.mxu0
    %v172 = vadd.f32 0.0, %v171
    %v173 = vpop.f32.mrf.mxu0
    %174 = vdwg.mxu0
    %175 = vmatpush.bf16.msra.mxu0 0
    %176 = vmatpush.bf16.msra.mxu0 0
    %177 = vmatpush.bf16.msra.mxu0 0
    %178 = vmatpush.bf16.msra.mxu0 0
    %179 = vmatpush.bf16.msra.mxu0 0
    %180 = vmatpush.bf16.msra.mxu0 %v154
    %181 = vmatpush.bf16.msra.mxu0 %v130
    %182 = vmatpush.bf16.msra.mxu0 %v126
    %183 = vmatmul.bf16.gmra.mxu0 %v147
    %v184 = vpop.f32.mrf.mxu0
    %v185 = vadd.f32 0.0, %v184
    %v186 = vpop.f32.mrf.mxu0
    %187 = vdwg.mxu0
    %188 = vmatpush.bf16.msra.mxu0 0
    %189 = vmatpush.bf16.msra.mxu0 0
    %190 = vmatpush.bf16.msra.mxu0 0
    %191 = vmatpush.bf16.msra.mxu0 0
    %192 = vmatpush.bf16.msra.mxu0 0
    %193 = vmatpush.bf16.msra.mxu0 %v157
    %194 = vmatpush.bf16.msra.mxu0 %v131
    %195 = vmatpush.bf16.msra.mxu0 %v127
    %196 = vmatmul.bf16.gmra.mxu0 %v147
    %v197 = vpop.f32.mrf.mxu0
    %v198 = vadd.f32 0.0, %v197
    %v199 = vpop.f32.mrf.mxu0
    %200 = vdwg.mxu0
    %201 = vmatpush.bf16.msra.mxu0 0
    %202 = vmatpush.bf16.msra.mxu0 0
    %203 = vmatpush.bf16.msra.mxu0 0
    %204 = vmatpush.bf16.msra.mxu0 0
    %205 = vmatpush.bf16.msra.mxu0 0
    %206 = vmatpush.bf16.msra.mxu0 %v160
    %207 = vmatpush.bf16.msra.mxu0 %v132
    %208 = vmatpush.bf16.msra.mxu0 %v128
    %209 = vmatmul.bf16.gmra.mxu0 %v147
    %v210 = vpop.f32.mrf.mxu0
    %v211 = vadd.f32 0.0, %v210
    %v212 = vpop.f32.mrf.mxu0
    %213 = vdwg.mxu0
    %v214 = vld [vmem:[#allocation7] sm:$0xf]
    %v216 = vperm.slane %v214, 0
    %v217 = vperm.slane %v214, 1
    %v218 = vperm.slane %v214, 2
    %v219 = vperm.slane %v214, 3
    %v224 = vmul.f32 %v172, %v216
    %v225 = vmul.f32 %v185, %v217
    %v226 = vmul.f32 %v198, %v218
    %v227 = vmul.f32 %v211, %v219
    %v228 = vld [vmem:[#allocation8] sm:$0xf]
    %v230 = vperm.slane %v228, 0
    %v231 = vperm.slane %v228, 1
    %v232 = vperm.slane %v228, 2
    %v233 = vperm.slane %v228, 3
    %v238 = vadd.f32 %v224, %v230
    %v239 = vadd.f32 %v225, %v231
    %v240 = vadd.f32 %v226, %v232
    %v241 = vadd.f32 %v227, %v233
    %vm242 = vcmp.gt.f32.partialorder %v238, 0.0
    %vm243 = vcmp.gt.f32.partialorder %v239, 0.0
    %vm244 = vcmp.gt.f32.partialorder %v240, 0.0
    %vm245 = vcmp.gt.f32.partialorder %v241, 0.0
    %v246 = vmul.f32 %v238, 0.2
    %v247 = vmul.f32 %v239, 0.2
    %v248 = vmul.f32 %v240, 0.2
    %v249 = vmul.f32 %v241, 0.2
    %v250 = vsel %vm242, %v238, %v246
    %v251 = vsel %vm243, %v239, %v247
    %v252 = vsel %vm244, %v240, %v248
    %v253 = vsel %vm245, %v241, %v249
    %v254 = vpack.c.bf16 %v251, %v250
    %v255 = vpack.c.bf16 %v253, %v252
    %256 = vst [vmem:[#allocation10] sm:$0xff] %v254
    %257 = vst [vmem:[#allocation10 + $0x8] sm:$0xff] %v255
    // Predicated region
    $region34: #{tpu_custom_call.1} parent=1 // pred_check
      _
    $region35: #{tpu_custom_call.1} parent=1 // pred_check_branch
      %259 = sbr.rel (0) target = $region37
    $region36: #{tpu_custom_call.1} parent=1 // pred_region
      %261 = vsyncadd [#allocation4], 0
      %s263 = sshll.u32 [#allocation10], 4
      %s264 = int_to_ptr.vmem [resolvable:$true] %s263
      %s265 = sshll.u32 %s4, 4
      %s266 = int_to_ptr.hbm [resolvable:$true] %s265
      %268 = dma.vmem_to_hbm [thread:$0]  %s264, 256, %s266, [#allocation4]
    $region37: #{tpu_custom_call.1} parent=1 // pred_fallthru
      _
    // Predicated region
    $region38: #{tpu_custom_call.1} parent=1 // pred_check
      _
    $region39: #{tpu_custom_call.1} parent=1 // pred_check_branch
      %270 = sbr.rel (0) target = $region41
    $region40: #{tpu_custom_call.1} parent=1 // pred_region
      %272 = dma.done [#allocation4], 256
    $region41: #{tpu_custom_call.1} parent=1 // pred_fallthru
      _
    %273 = vsyncpa [#allocation3], 1
    %274 = vsyncpa [#allocation6], 1
    %275 = vsyncpa [#allocation9], 1
    %276 = vsyncpa [#allocation4], 1

</llo_original>
